<compile_context>
chip_gen: v7x
topology: tpu7x:2x2x1
jax: 0.10.0
libtpu: 0.0.40
codegen_flags: <defaults>
</compile_context>

<pallas_src>
import numpy as np
import jax
import jax.numpy as jnp
from jax import lax
from jax.experimental import pallas as pl
from jax.experimental.pallas import tpu as pltpu


def _make_mlp_kernel(chunk, n_chunks):
    """Kernel closure over the static lane-chunk size / count."""

    def mlp_kernel(x_ref, w1_ref, b1_ref, w2_ref, b2_ref, w3_ref, b3_ref, o_ref):
        # Tiny resident weights/biases: load once per grid step (hoisted out of
        # the chunk loop so they live in vregs across all chunks).
        w1 = w1_ref[...]          # [hidden, in]      bf16
        w2 = w2_ref[...]          # [hidden, hidden]  bf16
        w3 = w3_ref[...]          # [1, hidden]       bf16
        b1 = b1_ref[...]          # [hidden, 1]       f32
        b2 = b2_ref[...]          # [hidden, 1]       f32
        b3 = b3_ref[...]          # [1, 1]            f32

        def body(c, carry):
            start = pl.multiple_of(c * chunk, chunk)
            xT = x_ref[:, pl.ds(start, chunk)]            # [in, chunk] bf16
            h1 = jnp.dot(w1, xT, preferred_element_type=jnp.float32)
            h1 = jnp.maximum(h1 + b1, 0.0).astype(jnp.bfloat16)
            # Dropout(p=0.2): identity in eval mode.
            h2 = jnp.dot(w2, h1, preferred_element_type=jnp.float32)
            h2 = jnp.maximum(h2 + b2, 0.0).astype(jnp.bfloat16)
            # Dropout(p=0.2): identity in eval mode.
            out = jnp.dot(w3, h2, preferred_element_type=jnp.float32) + b3
            o_ref[:, pl.ds(start, chunk)] = out.astype(o_ref.dtype)
            return carry

        lax.fori_loop(0, n_chunks, body, None,
                      unroll=True if n_chunks <= 8 else 8)

    return mlp_kernel


def _select_batch_tiling(batch, batch_tile):
    """Pick (bt, padded) so padding is spread thin and grid is even (>=2) when
    there is enough work for both v7x TensorCores."""
    n_tiles = max(1, pl.cdiv(batch, batch_tile))
    if batch >= 256:
        n_tiles = max(2, n_tiles)
        if n_tiles % 2:
            n_tiles += 1
    bt = pl.cdiv(pl.cdiv(batch, n_tiles), 128) * 128
    bt = max(128, min(bt, pl.cdiv(batch_tile, 128) * 128))
    padded = pl.cdiv(batch, bt) * bt
    return bt, padded


def delivery_time_model_forward(x, params, *, batch_tile=16384):
    """x: [batch, input_dim] f32; params in PyTorch layout (W:[out,in], b:[out,1])."""
    w1, b1, w2, b2, w3, b3 = params
    batch, input_dim = x.shape
    hidden = w1.shape[0]

    bt, padded = _select_batch_tiling(batch, batch_tile)
    grid = (padded // bt,)

    # In-kernel lane-chunk size: largest of {256, 128} that divides bt.
    chunk = 256 if bt % 256 == 0 else 128
    n_chunks = bt // chunk

    # Transposed bf16 input [input_dim, batch]; pad only if needed, in one pass.
    xT = x.astype(jnp.bfloat16).T
    if padded != batch:
        xT = jnp.pad(xT, ((0, 0), (0, padded - batch)))

    w1b = w1.astype(jnp.bfloat16)
    w2b = w2.astype(jnp.bfloat16)
    w3b = w3.astype(jnp.bfloat16)
    b1f = b1.astype(jnp.float32)
    b2f = b2.astype(jnp.float32)
    b3f = b3.astype(jnp.float32)

    flops = 2 * batch * (input_dim * hidden + hidden * hidden + hidden)
    bytes_accessed = (
        xT.size * 2 + padded * 4
        + (w1.size + w2.size + w3.size) * 2
        + (b1.size + b2.size + b3.size) * 4
    )
    cost = pl.CostEstimate(flops=flops, transcendentals=0,
                           bytes_accessed=bytes_accessed)

    out_t = pl.pallas_call(
        _make_mlp_kernel(chunk, n_chunks),
        out_shape=jax.ShapeDtypeStruct((1, padded), jnp.float32),
        grid=grid,
        in_specs=[
            # x tile marches along the batch axis; everything else is resident.
            pl.BlockSpec((input_dim, bt), lambda i: (0, i)),
            pl.BlockSpec((hidden, input_dim), lambda i: (0, 0)),
            pl.BlockSpec((hidden, 1), lambda i: (0, 0)),
            pl.BlockSpec((hidden, hidden), lambda i: (0, 0)),
            pl.BlockSpec((hidden, 1), lambda i: (0, 0)),
            pl.BlockSpec((1, hidden), lambda i: (0, 0)),
            pl.BlockSpec((1, 1), lambda i: (0, 0)),
        ],
        out_specs=pl.BlockSpec((1, bt), lambda i: (0, i)),
        compiler_params=pltpu.CompilerParams(
            dimension_semantics=("parallel",),
            vmem_limit_bytes=32 * 1024 * 1024,
        ),
        cost_estimate=cost,
    )(xT, w1b, b1f, w2b, b2f, w3b, b3f)

    # [1, padded] -> [batch, 1]  (padded columns hold garbage and are dropped)
    return out_t[0, :batch].reshape(batch, 1)


def init_params(key, input_dim, hidden_dim):
    """PyTorch nn.Linear default init, weights in PyTorch [out, in] layout."""
    k1, k2, k3, k4, k5, k6 = jax.random.split(key, 6)

    def uniform(k, shape, fan_in):
        bound = 1.0 / np.sqrt(fan_in)
        return jax.random.uniform(k, shape, jnp.float32, -bound, bound)

    w1 = uniform(k1, (hidden_dim, input_dim), input_dim)
    b1 = uniform(k2, (hidden_dim, 1), input_dim)
    w2 = uniform(k3, (hidden_dim, hidden_dim), hidden_dim)
    b2 = uniform(k4, (hidden_dim, 1), hidden_dim)
    w3 = uniform(k5, (1, hidden_dim), hidden_dim)
    b3 = uniform(k6, (1, 1), hidden_dim)
    return (w1, b1, w2, b2, w3, b3)


def reference_forward(x, params):
    """Pure-JAX reference with the same bf16-input / f32-accumulate numerics."""
    w1, b1, w2, b2, w3, b3 = params
    xb = x.astype(jnp.bfloat16)
    h1 = jnp.dot(xb, w1.astype(jnp.bfloat16).T,
                 preferred_element_type=jnp.float32) + b1.T
    h1 = jnp.maximum(h1, 0.0).astype(jnp.bfloat16)
    h2 = jnp.dot(h1, w2.astype(jnp.bfloat16).T,
                 preferred_element_type=jnp.float32) + b2.T
    h2 = jnp.maximum(h2, 0.0).astype(jnp.bfloat16)
    return jnp.dot(h2, w3.astype(jnp.bfloat16).T,
                   preferred_element_type=jnp.float32) + b3.T


if __name__ == "__main__":
    key = jax.random.PRNGKey(0)
    k_x, k_p = jax.random.split(key)

    batch = 8
    input_dim = 16
    hidden_dim = 64  # module default

    x = jax.random.normal(k_x, (batch, input_dim), dtype=jnp.float32)
    params = init_params(k_p, input_dim, hidden_dim)

    out = jax.block_until_ready(delivery_time_model_forward(x, params))
    ref = jax.block_until_ready(reference_forward(x, params))

    assert out.shape == (batch, 1)
    np.testing.assert_allclose(np.asarray(out), np.asarray(ref),
                               rtol=1e-2, atol=1e-2)

    # Exercise the multi-tile / in-kernel chunking path too (batch >= 256,
    # not a multiple of the tile size).
    batch2 = 513
    x2 = jax.random.normal(k_x, (batch2, input_dim), dtype=jnp.float32)
    out2 = jax.block_until_ready(delivery_time_model_forward(x2, params))
    ref2 = jax.block_until_ready(reference_forward(x2, params))
    assert out2.shape == (batch2, 1)
    np.testing.assert_allclose(np.asarray(out2), np.asarray(ref2),
                               rtol=1e-2, atol=1e-2)

    print("KERNEL_OK")
</pallas_src>

<mosaic_0001>
module attributes {stable_mosaic.version = 11 : i64} {
  func.func @mlp_kernel(%arg0: i32, %arg1: memref<16x128xbf16, #tpu.memory_space<vmem>>, %arg2: memref<64x16xbf16, #tpu.memory_space<vmem>>, %arg3: memref<64x1xf32, #tpu.memory_space<vmem>>, %arg4: memref<64x64xbf16, #tpu.memory_space<vmem>>, %arg5: memref<64x1xf32, #tpu.memory_space<vmem>>, %arg6: memref<1x64xbf16, #tpu.memory_space<vmem>>, %arg7: memref<1x1xf32, #tpu.memory_space<vmem>>, %arg8: memref<1x128xf32, #tpu.memory_space<vmem>>) attributes {dimension_semantics = [#tpu.dimension_semantics<parallel>], iteration_bounds = array<i64: 1>, scalar_prefetch = 0 : i64, scratch_operands = 0 : i64, tpu.core_type = #tpu.core_type<tc>, window_params = [{transform_indices = @transform_0, window_bounds = array<i64: 16, 128>}, {pipeline_mode = #tpu.pipeline_mode<synchronous>, transform_indices = @transform_1, window_bounds = array<i64: 64, 16>}, {pipeline_mode = #tpu.pipeline_mode<synchronous>, transform_indices = @transform_2, window_bounds = array<i64: 64, 1>}, {pipeline_mode = #tpu.pipeline_mode<synchronous>, transform_indices = @transform_3, window_bounds = array<i64: 64, 64>}, {pipeline_mode = #tpu.pipeline_mode<synchronous>, transform_indices = @transform_4, window_bounds = array<i64: 64, 1>}, {pipeline_mode = #tpu.pipeline_mode<synchronous>, transform_indices = @transform_5, window_bounds = array<i64: 1, 64>}, {pipeline_mode = #tpu.pipeline_mode<synchronous>, transform_indices = @transform_6, window_bounds = array<i64: 1, 1>}, {transform_indices = @transform_7, window_bounds = array<i64: 1, 128>}]} {
    %c0 = arith.constant 0 : index
    %c0_0 = arith.constant 0 : index
    %0 = vector.load %arg2[%c0, %c0_0] : memref<64x16xbf16, #tpu.memory_space<vmem>>, vector<64x16xbf16>
    %c0_1 = arith.constant 0 : index
    %c0_2 = arith.constant 0 : index
    %1 = vector.load %arg4[%c0_1, %c0_2] : memref<64x64xbf16, #tpu.memory_space<vmem>>, vector<64x64xbf16>
    %c0_3 = arith.constant 0 : index
    %c0_4 = arith.constant 0 : index
    %2 = vector.load %arg6[%c0_3, %c0_4] : memref<1x64xbf16, #tpu.memory_space<vmem>>, vector<1x64xbf16>
    %c0_5 = arith.constant 0 : index
    %c0_6 = arith.constant 0 : index
    %3 = vector.load %arg3[%c0_5, %c0_6] : memref<64x1xf32, #tpu.memory_space<vmem>>, vector<64x1xf32>
    %c0_7 = arith.constant 0 : index
    %c0_8 = arith.constant 0 : index
    %4 = vector.load %arg5[%c0_7, %c0_8] : memref<64x1xf32, #tpu.memory_space<vmem>>, vector<64x1xf32>
    %c0_9 = arith.constant 0 : index
    %c0_10 = arith.constant 0 : index
    %5 = vector.load %arg7[%c0_9, %c0_10] : memref<1x1xf32, #tpu.memory_space<vmem>>, vector<1x1xf32>
    %c0_i32 = arith.constant 0 : i32
    %c128_i32 = arith.constant 128 : i32
    %6 = arith.muli %c0_i32, %c128_i32 : i32
    %7 = tpu.assume_multiple %6, 128 : i32
    %c0_11 = arith.constant 0 : index
    %8 = arith.index_cast %7 : i32 to index
    %9 = vector.load %arg1[%c0_11, %8] : memref<16x128xbf16, #tpu.memory_space<vmem>>, vector<16x128xbf16>
    %cst = arith.constant dense<0.000000e+00> : vector<64x128xf32>
    %10 = tpu.matmul %0, %9, %cst {dimension_numbers = #tpu.dot_dimension_numbers<[1], [0], [0], [1], [0, 0, 1, 1], [], []>} : vector<64x16xbf16>, vector<16x128xbf16>, vector<64x128xf32> -> vector<64x128xf32>
    %11 = vector.broadcast %3 : vector<64x1xf32> to vector<64x128xf32>
    %12 = arith.addf %10, %11 : vector<64x128xf32>
    %cst_12 = arith.constant 0.000000e+00 : f32
    %13 = vector.broadcast %cst_12 : f32 to vector<64x128xf32>
    %14 = arith.maximumf %12, %13 : vector<64x128xf32>
    %15 = arith.truncf %14 : vector<64x128xf32> to vector<64x128xbf16>
    %cst_13 = arith.constant dense<0.000000e+00> : vector<64x128xf32>
    %16 = tpu.matmul %1, %15, %cst_13 {dimension_numbers = #tpu.dot_dimension_numbers<[1], [0], [0], [1], [0, 0, 1, 1], [], []>} : vector<64x64xbf16>, vector<64x128xbf16>, vector<64x128xf32> -> vector<64x128xf32>
    %17 = vector.broadcast %4 : vector<64x1xf32> to vector<64x128xf32>
    %18 = arith.addf %16, %17 : vector<64x128xf32>
    %cst_14 = arith.constant 0.000000e+00 : f32
    %19 = vector.broadcast %cst_14 : f32 to vector<64x128xf32>
    %20 = arith.maximumf %18, %19 : vector<64x128xf32>
    %21 = arith.truncf %20 : vector<64x128xf32> to vector<64x128xbf16>
    %cst_15 = arith.constant dense<0.000000e+00> : vector<1x128xf32>
    %22 = tpu.matmul %2, %21, %cst_15 {dimension_numbers = #tpu.dot_dimension_numbers<[1], [0], [0], [1], [0, 0, 1, 1], [], []>} : vector<1x64xbf16>, vector<64x128xbf16>, vector<1x128xf32> -> vector<1x128xf32>
    %23 = vector.broadcast %5 : vector<1x1xf32> to vector<1x128xf32>
    %24 = arith.addf %22, %23 : vector<1x128xf32>
    %c0_16 = arith.constant 0 : index
    %25 = arith.index_cast %7 : i32 to index
    %26 = vector.load %arg8[%c0_16, %25] : memref<1x128xf32, #tpu.memory_space<vmem>>, vector<1x128xf32>
    tpu.vector_store %arg8[%c0_16, %25], %24 {strides = array<i32>} : memref<1x128xf32, #tpu.memory_space<vmem>>, vector<1x128xf32>,
    %c1_i32 = arith.constant 1 : i32
    return
  }
  func.func @transform_0(%arg0: i32) -> (i32, i32) {
    %c0_i32 = arith.constant 0 : i32
    %c0_i32_0 = arith.constant 0 : i32
    return %c0_i32, %arg0 : i32, i32
  }
  func.func @transform_1(%arg0: i32) -> (i32, i32) {
    %c0_i32 = arith.constant 0 : i32
    %c0_i32_0 = arith.constant 0 : i32
    %c0_i32_1 = arith.constant 0 : i32
    return %c0_i32, %c0_i32_0 : i32, i32
  }
  func.func @transform_2(%arg0: i32) -> (i32, i32) {
    %c0_i32 = arith.constant 0 : i32
    %c0_i32_0 = arith.constant 0 : i32
    %c0_i32_1 = arith.constant 0 : i32
    return %c0_i32, %c0_i32_0 : i32, i32
  }
  func.func @transform_3(%arg0: i32) -> (i32, i32) {
    %c0_i32 = arith.constant 0 : i32
    %c0_i32_0 = arith.constant 0 : i32
    %c0_i32_1 = arith.constant 0 : i32
    return %c0_i32, %c0_i32_0 : i32, i32
  }
  func.func @transform_4(%arg0: i32) -> (i32, i32) {
    %c0_i32 = arith.constant 0 : i32
    %c0_i32_0 = arith.constant 0 : i32
    %c0_i32_1 = arith.constant 0 : i32
    return %c0_i32, %c0_i32_0 : i32, i32
  }
  func.func @transform_5(%arg0: i32) -> (i32, i32) {
    %c0_i32 = arith.constant 0 : i32
    %c0_i32_0 = arith.constant 0 : i32
    %c0_i32_1 = arith.constant 0 : i32
    return %c0_i32, %c0_i32_0 : i32, i32
  }
  func.func @transform_6(%arg0: i32) -> (i32, i32) {
    %c0_i32 = arith.constant 0 : i32
    %c0_i32_0 = arith.constant 0 : i32
    %c0_i32_1 = arith.constant 0 : i32
    return %c0_i32, %c0_i32_0 : i32, i32
  }
  func.func @transform_7(%arg0: i32) -> (i32, i32) {
    %c0_i32 = arith.constant 0 : i32
    %c0_i32_0 = arith.constant 0 : i32
    return %c0_i32, %arg0 : i32, i32
  }
}

</mosaic_0001>

<llo_original>
// kernel: tpu_custom_call.1
$region0: #{tpu_custom_call.1}
  #allocation0 [shape = 'u32[]', space=smem, size = 0x4, offset = 0x4, fixed_abs, tag = 'smem constant byte address 0x4 - core index']
  #allocation1 [shape = 'u32[144,128]{1,0:T(1,128)}', space=vmem, size = 0x12000, scoped, tag = 'internal scratch']
  #allocation2 [shape = 'f32[1,1]{1,0:T(1,128)S(1)}', space=vmem, size = 0x200, scoped, tag = 'scoped memory for tpu_custom_call.1']
  %s0 = inlined_call_operand.vmem [shape: bf16[16,128], index: 0, kind: input, shape index: {}]
  %s1 = inlined_call_operand.vmem [shape: bf16[64,16], index: 1, kind: input, shape index: {}]
  %s2 = inlined_call_operand.vmem [shape: f32[64,1], index: 2, kind: input, shape index: {}]
  %s3 = inlined_call_operand.vmem [shape: bf16[64,64], index: 3, kind: input, shape index: {}]
  %s4 = inlined_call_operand.vmem [shape: f32[64,1], index: 4, kind: input, shape index: {}]
  %s5 = inlined_call_operand.vmem [shape: bf16[1,64], index: 5, kind: input, shape index: {}]
  %s6 = inlined_call_operand.<no memory space> [shape: f32[1,1], index: 6, kind: input, shape index: {}]
  %s7 = inlined_call_operand.hbm [shape: f32[1,128], index: 7, kind: output, shape index: {}]
  %s8 = sld [smem:[#allocation0]]
  $region38: #{tpu_custom_call.1} parent=0
    _
  %s10 = ssub.s32 1, %s8
  %s11 = scalar_select 0, %s10, %s8
  %v12 = vstv %s6
  %13 = vst [vmem:[#allocation2] sm:$0x1] %v12
  $region1: #{tpu_custom_call.1} parent=0
    #allocation3 [shape = 'u8[512]{0}', space=vmem, size = 0x400, scoped, tag = 'output window, operand 0, single buffered']
    #allocation4 [shape = 's32[1]{0}', space=sflag, size = 0x4, scoped, tag = 'scoped memory for tpu_custom_call.1']
    %14 = vsyncpa [#allocation4], 0
    // Predicated region
    $region2: #{tpu_custom_call.1} parent=1 // pred_check
      _
    $region3: #{tpu_custom_call.1} parent=1 // pred_check_branch
      %16 = sbr.rel (0) target = $region5
    $region4: #{tpu_custom_call.1} parent=1 // pred_region
      _
    $region5: #{tpu_custom_call.1} parent=1 // pred_fallthru
      _
    // Predicated region
    $region6: #{tpu_custom_call.1} parent=1 // pred_check
      _
    $region7: #{tpu_custom_call.1} parent=1 // pred_check_branch
      %18 = sbr.rel (0) target = $region9
    $region8: #{tpu_custom_call.1} parent=1 // pred_region
      _
    $region9: #{tpu_custom_call.1} parent=1 // pred_fallthru
      _
    // Predicated region
    $region10: #{tpu_custom_call.1} parent=1 // pred_check
      _
    $region11: #{tpu_custom_call.1} parent=1 // pred_check_branch
      %20 = sbr.rel (0) target = $region13
    $region12: #{tpu_custom_call.1} parent=1 // pred_region
      _
    $region13: #{tpu_custom_call.1} parent=1 // pred_fallthru
      _
    // Predicated region
    $region14: #{tpu_custom_call.1} parent=1 // pred_check
      _
    $region15: #{tpu_custom_call.1} parent=1 // pred_check_branch
      %22 = sbr.rel (0) target = $region17
    $region16: #{tpu_custom_call.1} parent=1 // pred_region
      _
    $region17: #{tpu_custom_call.1} parent=1 // pred_fallthru
      _
    // Predicated region
    $region18: #{tpu_custom_call.1} parent=1 // pred_check
      _
    $region19: #{tpu_custom_call.1} parent=1 // pred_check_branch
      %24 = sbr.rel (0) target = $region21
    $region20: #{tpu_custom_call.1} parent=1 // pred_region
      _
    $region21: #{tpu_custom_call.1} parent=1 // pred_fallthru
      _
    // Predicated region
    $region22: #{tpu_custom_call.1} parent=1 // pred_check
      _
    $region23: #{tpu_custom_call.1} parent=1 // pred_check_branch
      %26 = sbr.rel (0) target = $region25
    $region24: #{tpu_custom_call.1} parent=1 // pred_region
      _
    $region25: #{tpu_custom_call.1} parent=1 // pred_fallthru
      _
    // Predicated region
    $region26: #{tpu_custom_call.1} parent=1 // pred_check
      _
    $region27: #{tpu_custom_call.1} parent=1 // pred_check_branch
      %28 = sbr.rel (0) target = $region29
    $region28: #{tpu_custom_call.1} parent=1 // pred_region
      _
    $region29: #{tpu_custom_call.1} parent=1 // pred_fallthru
      _
    %v30 = vld [vmem:[%s1] sm:$0xf]
    %v31 = vld [vmem:[%s1 + $0x4] sm:$0xf]
    %v32 = vld [vmem:[%s1 + $0x8] sm:$0xf]
    %v33 = vld [vmem:[%s1 + $0xc] sm:$0xf]
    %v34 = vld [vmem:[%s1 + $0x10] sm:$0xf]
    %v35 = vld [vmem:[%s1 + $0x14] sm:$0xf]
    %v36 = vld [vmem:[%s1 + $0x18] sm:$0xf]
    %v37 = vld [vmem:[%s1 + $0x1c] sm:$0xf]
    %v38 = vld [vmem:[%s3] sm:$0xf]
    %v39 = vld [vmem:[%s3 + $0x4] sm:$0xf]
    %v40 = vld [vmem:[%s3 + $0x8] sm:$0xf]
    %v41 = vld [vmem:[%s3 + $0xc] sm:$0xf]
    %v42 = vld [vmem:[%s3 + $0x10] sm:$0xf]
    %v43 = vld [vmem:[%s3 + $0x14] sm:$0xf]
    %v44 = vld [vmem:[%s3 + $0x18] sm:$0xf]
    %v45 = vld [vmem:[%s3 + $0x1c] sm:$0xf]
    %v46 = vld [vmem:[%s5] sm:$0x1]
    %v47 = vld [vmem:[%s2] sm:$0xff]
    %v48 = vld [vmem:[%s2 + $0x8] sm:$0xff]
    %v49 = vld [vmem:[%s2 + $0x10] sm:$0xff]
    %v50 = vld [vmem:[%s2 + $0x18] sm:$0xff]
    %v51 = vld [vmem:[%s2 + $0x20] sm:$0xff]
    %v52 = vld [vmem:[%s2 + $0x28] sm:$0xff]
    %v53 = vld [vmem:[%s2 + $0x30] sm:$0xff]
    %v54 = vld [vmem:[%s2 + $0x38] sm:$0xff]
    %v55 = vld [vmem:[%s4] sm:$0xff]
    %v56 = vld [vmem:[%s4 + $0x8] sm:$0xff]
    %v57 = vld [vmem:[%s4 + $0x10] sm:$0xff]
    %v58 = vld [vmem:[%s4 + $0x18] sm:$0xff]
    %v59 = vld [vmem:[%s4 + $0x20] sm:$0xff]
    %v60 = vld [vmem:[%s4 + $0x28] sm:$0xff]
    %v61 = vld [vmem:[%s4 + $0x30] sm:$0xff]
    %v62 = vld [vmem:[%s4 + $0x38] sm:$0xff]
    %v63 = vld [vmem:[#allocation2] sm:$0x1]
    %v64 = vld [vmem:[%s0] sm:$0xf]
    %v65 = vld [vmem:[%s0 + $0x4] sm:$0xf]
    %67 = vset.pattern.permute.xlu0 0
    %68 = vperm.xlu0 %67, %v47
    %v69 = vpop.permute.xlu0 %68
    %72 = vset.pattern.permute.xlu0 0
    %73 = vperm.xlu0 %72, %v48
    %v74 = vpop.permute.xlu0 %73
    %77 = vset.pattern.permute.xlu0 0
    %78 = vperm.xlu0 %77, %v49
    %v79 = vpop.permute.xlu0 %78
    %82 = vset.pattern.permute.xlu0 0
    %83 = vperm.xlu0 %82, %v50
    %v84 = vpop.permute.xlu0 %83
    %87 = vset.pattern.permute.xlu0 0
    %88 = vperm.xlu0 %87, %v51
    %v89 = vpop.permute.xlu0 %88
    %92 = vset.pattern.permute.xlu0 0
    %93 = vperm.xlu0 %92, %v52
    %v94 = vpop.permute.xlu0 %93
    %97 = vset.pattern.permute.xlu0 0
    %98 = vperm.xlu0 %97, %v53
    %v99 = vpop.permute.xlu0 %98
    %102 = vset.pattern.permute.xlu0 0
    %103 = vperm.xlu0 %102, %v54
    %v104 = vpop.permute.xlu0 %103
    %v114 = vunpack.c.l.b16 %v30
    %v115 = vunpack.c.l.b16 %v31
    %v116 = vunpack.c.l.b16 %v32
    %v117 = vunpack.c.l.b16 %v33
    %v118 = vunpack.c.l.b16 %v34
    %v119 = vunpack.c.l.b16 %v35
    %v120 = vunpack.c.l.b16 %v36
    %v121 = vunpack.c.l.b16 %v37
    %v122 = vpack.c.b16 %v115, %v114
    %v123 = vpack.c.b16 %v117, %v116
    %v124 = vpack.c.b16 %v119, %v118
    %v125 = vpack.c.b16 %v121, %v120
    %v128 = vunpack.c.l.b16 %v64
    %v129 = vunpack.c.l.b16 %v65
    %v130 = vpack.c.b16 %v129, %v128
    %vm132 = vcmask 130048
    %v134 = vsel %vm132, %v122, 0
    %v137 = vsel %vm132, %v123, 0
    %v140 = vsel %vm132, %v124, 0
    %v143 = vsel %vm132, %v125, 0
    %145 = vmatprep.subr.bf16.mxu0 0
    %146 = vmatpush1.bf16.msra.mxu0 %v130
    %147 = vmatprep.subr.bf16.mxu0 0
    %148 = vmatpush1.bf16.msra.mxu0 0
    %149 = vmatprep.subr.bf16.mxu0 0
    %150 = vmatpush1.bf16.msra.mxu0 0
    %151 = vmatprep.subr.bf16.mxu0 0
    %152 = vmatpush1.bf16.msra.mxu0 0
    %153 = vmatprep.subr.bf16.mxu0 0
    %154 = vmatpush1.bf16.msra.mxu0 0
    %155 = vmatprep.subr.bf16.mxu0 0
    %156 = vmatpush1.bf16.msra.mxu0 0
    %157 = vmatprep.subr.bf16.mxu0 0
    %158 = vmatpush1.bf16.msra.mxu0 0
    %159 = vmatprep.subr.bf16.mxu0 0
    %160 = vmatpush1.bf16.msra.mxu0 0
    %161 = vmatprep.subr.bf16.mxu0 0
    %162 = vmatpush1.bf16.msra.mxu0 0
    %163 = vmatprep.subr.bf16.mxu0 0
    %164 = vmatpush1.bf16.msra.mxu0 0
    %165 = vmatprep.subr.bf16.mxu0 0
    %166 = vmatpush1.bf16.msra.mxu0 0
    %167 = vmatprep.subr.bf16.mxu0 0
    %168 = vmatpush1.bf16.msra.mxu0 0
    %169 = vmatprep.subr.bf16.mxu0 0
    %170 = vmatpush1.bf16.msra.mxu0 0
    %171 = vmatprep.subr.bf16.mxu0 0
    %172 = vmatpush1.bf16.msra.mxu0 0
    %173 = vmatprep.subr.bf16.mxu0 0
    %174 = vmatpush1.bf16.msra.mxu0 0
    %175 = vmatprep.subr.bf16.mxu0 0
    %176 = vmatpush1.bf16.msra.mxu0 0
    %177 = vmatprep.mubr.bf16.mxu0 0
    %178 = vmatmul.mubr.bf16.gmra.mrb[0].mxu0 %v134
    %v179 = vpop.f32.mrb[0].mxu0
    %v180 = vadd.f32 %v69, %v179
    %v181 = vpop.f32.mrb[0].mxu0
    %v182 = vpop.f32.mrb[0].mxu0
    %v183 = vadd.f32 %v74, %v182
    %v184 = vpop.f32.mrb[0].mxu0
    %185 = vmatprep.mubr.bf16.mxu0 0
    %186 = vmatmul.mubr.bf16.gmra.mrb[0].mxu0 %v137
    %v187 = vpop.f32.mrb[0].mxu0
    %v188 = vadd.f32 %v79, %v187
    %v189 = vpop.f32.mrb[0].mxu0
    %v190 = vpop.f32.mrb[0].mxu0
    %v191 = vadd.f32 %v84, %v190
    %v192 = vpop.f32.mrb[0].mxu0
    %193 = vmatprep.mubr.bf16.mxu0 0
    %194 = vmatmul.mubr.bf16.gmra.mrb[0].mxu0 %v140
    %v195 = vpop.f32.mrb[0].mxu0
    %v196 = vadd.f32 %v89, %v195
    %v197 = vpop.f32.mrb[0].mxu0
    %v198 = vpop.f32.mrb[0].mxu0
    %v199 = vadd.f32 %v94, %v198
    %v200 = vpop.f32.mrb[0].mxu0
    %201 = vmatprep.mubr.bf16.mxu0 0
    %202 = vmatmul.mubr.bf16.gmra.mrb[0].mxu0 %v143
    %v203 = vpop.f32.mrb[0].mxu0
    %v204 = vadd.f32 %v99, %v203
    %v205 = vpop.f32.mrb[0].mxu0
    %v206 = vpop.f32.mrb[0].mxu0
    %v207 = vadd.f32 %v104, %v206
    %v208 = vpop.f32.mrb[0].mxu0
    %209 = vdwg.mxu0
    %v210 = vmax.f32 %v180, 0.0
    %v211 = vmax.f32 %v183, 0.0
    %v212 = vmax.f32 %v188, 0.0
    %v213 = vmax.f32 %v191, 0.0
    %v214 = vmax.f32 %v196, 0.0
    %v215 = vmax.f32 %v199, 0.0
    %v216 = vmax.f32 %v204, 0.0
    %v217 = vmax.f32 %v207, 0.0
    %v218 = vpack.c.bf16 %v211, %v210
    %v219 = vpack.c.bf16 %v213, %v212
    %v220 = vpack.c.bf16 %v215, %v214
    %v221 = vpack.c.bf16 %v217, %v216
    %223 = vset.pattern.permute.xlu0 0
    %224 = vperm.xlu0 %223, %v55
    %v225 = vpop.permute.xlu0 %224
    %228 = vset.pattern.permute.xlu0 0
    %229 = vperm.xlu0 %228, %v56
    %v230 = vpop.permute.xlu0 %229
    %233 = vset.pattern.permute.xlu0 0
    %234 = vperm.xlu0 %233, %v57
    %v235 = vpop.permute.xlu0 %234
    %238 = vset.pattern.permute.xlu0 0
    %239 = vperm.xlu0 %238, %v58
    %v240 = vpop.permute.xlu0 %239
    %243 = vset.pattern.permute.xlu0 0
    %244 = vperm.xlu0 %243, %v59
    %v245 = vpop.permute.xlu0 %244
    %248 = vset.pattern.permute.xlu0 0
    %249 = vperm.xlu0 %248, %v60
    %v250 = vpop.permute.xlu0 %249
    %253 = vset.pattern.permute.xlu0 0
    %254 = vperm.xlu0 %253, %v61
    %v255 = vpop.permute.xlu0 %254
    %258 = vset.pattern.permute.xlu0 0
    %259 = vperm.xlu0 %258, %v62
    %v260 = vpop.permute.xlu0 %259
    %v270 = vunpack.c.l.b16 %v38
    %v271 = vunpack.c.l.b16 %v39
    %v272 = vunpack.c.l.b16 %v40
    %v273 = vunpack.c.l.b16 %v41
    %v274 = vunpack.c.l.b16 %v42
    %v275 = vunpack.c.l.b16 %v43
    %v276 = vunpack.c.l.b16 %v44
    %v277 = vunpack.c.l.b16 %v45
    %v278 = vpack.c.b16 %v271, %v270
    %v279 = vpack.c.b16 %v273, %v272
    %v280 = vpack.c.b16 %v275, %v274
    %v281 = vpack.c.b16 %v277, %v276
    %vm282 = vcmask 523264
    %v284 = vsel %vm282, %v278, 0
    %v287 = vsel %vm282, %v279, 0
    %v290 = vsel %vm282, %v280, 0
    %v293 = vsel %vm282, %v281, 0
    %295 = vmatprep.subr.bf16.mxu0 0
    %296 = vmatpush1.bf16.msra.mxu0 %v218
    %297 = vmatprep.subr.bf16.mxu0 0
    %298 = vmatpush1.bf16.msra.mxu0 %v219
    %299 = vmatprep.subr.bf16.mxu0 0
    %300 = vmatpush1.bf16.msra.mxu0 %v220
    %301 = vmatprep.subr.bf16.mxu0 0
    %302 = vmatpush1.bf16.msra.mxu0 %v221
    %303 = vmatprep.subr.bf16.mxu0 0
    %304 = vmatpush1.bf16.msra.mxu0 0
    %305 = vmatprep.subr.bf16.mxu0 0
    %306 = vmatpush1.bf16.msra.mxu0 0
    %307 = vmatprep.subr.bf16.mxu0 0
    %308 = vmatpush1.bf16.msra.mxu0 0
    %309 = vmatprep.subr.bf16.mxu0 0
    %310 = vmatpush1.bf16.msra.mxu0 0
    %311 = vmatprep.subr.bf16.mxu0 0
    %312 = vmatpush1.bf16.msra.mxu0 0
    %313 = vmatprep.subr.bf16.mxu0 0
    %314 = vmatpush1.bf16.msra.mxu0 0
    %315 = vmatprep.subr.bf16.mxu0 0
    %316 = vmatpush1.bf16.msra.mxu0 0
    %317 = vmatprep.subr.bf16.mxu0 0
    %318 = vmatpush1.bf16.msra.mxu0 0
    %319 = vmatprep.subr.bf16.mxu0 0
    %320 = vmatpush1.bf16.msra.mxu0 0
    %321 = vmatprep.subr.bf16.mxu0 0
    %322 = vmatpush1.bf16.msra.mxu0 0
    %323 = vmatprep.subr.bf16.mxu0 0
    %324 = vmatpush1.bf16.msra.mxu0 0
    %325 = vmatprep.subr.bf16.mxu0 0
    %326 = vmatpush1.bf16.msra.mxu0 0
    %327 = vmatprep.mubr.bf16.mxu0 0
    %328 = vmatmul.mubr.bf16.gmra.mrb[0].mxu0 %v284
    %v329 = vpop.f32.mrb[0].mxu0
    %v330 = vadd.f32 %v225, %v329
    %v331 = vpop.f32.mrb[0].mxu0
    %v332 = vpop.f32.mrb[0].mxu0
    %v333 = vadd.f32 %v230, %v332
    %v334 = vpop.f32.mrb[0].mxu0
    %335 = vmatprep.mubr.bf16.mxu0 0
    %336 = vmatmul.mubr.bf16.gmra.mrb[0].mxu0 %v287
    %v337 = vpop.f32.mrb[0].mxu0
    %v338 = vadd.f32 %v235, %v337
    %v339 = vpop.f32.mrb[0].mxu0
    %v340 = vpop.f32.mrb[0].mxu0
    %v341 = vadd.f32 %v240, %v340
    %v342 = vpop.f32.mrb[0].mxu0
    %343 = vmatprep.mubr.bf16.mxu0 0
    %344 = vmatmul.mubr.bf16.gmra.mrb[0].mxu0 %v290
    %v345 = vpop.f32.mrb[0].mxu0
    %v346 = vadd.f32 %v245, %v345
    %v347 = vpop.f32.mrb[0].mxu0
    %v348 = vpop.f32.mrb[0].mxu0
    %v349 = vadd.f32 %v250, %v348
    %v350 = vpop.f32.mrb[0].mxu0
    %351 = vmatprep.mubr.bf16.mxu0 0
    %352 = vmatmul.mubr.bf16.gmra.mrb[0].mxu0 %v293
    %v353 = vpop.f32.mrb[0].mxu0
    %v354 = vadd.f32 %v255, %v353
    %v355 = vpop.f32.mrb[0].mxu0
    %v356 = vpop.f32.mrb[0].mxu0
    %v357 = vadd.f32 %v260, %v356
    %v358 = vpop.f32.mrb[0].mxu0
    %359 = vdwg.mxu0
    %v360 = vmax.f32 %v330, 0.0
    %v361 = vmax.f32 %v333, 0.0
    %v362 = vmax.f32 %v338, 0.0
    %v363 = vmax.f32 %v341, 0.0
    %v364 = vmax.f32 %v346, 0.0
    %v365 = vmax.f32 %v349, 0.0
    %v366 = vmax.f32 %v354, 0.0
    %v367 = vmax.f32 %v357, 0.0
    %v368 = vpack.c.bf16 %v361, %v360
    %v369 = vpack.c.bf16 %v363, %v362
    %v370 = vpack.c.bf16 %v365, %v364
    %v371 = vpack.c.bf16 %v367, %v366
    %373 = vset.pattern.permute.xlu0 0
    %374 = vperm.xlu0 %373, %v63
    %v375 = vpop.permute.xlu0 %374
    %v377 = vlaneseq
    %v378 = vshrl.u32 %v377, 7
    %v379 = vsub.s32 0, %v378
    %v380 = vrot.slane %v375, %v379
    %v382 = vsel %vm282, %v46, 0
    %384 = vmatprep.subr.bf16.mxu0 0
    %385 = vmatpush1.bf16.msra.mxu0 %v368
    %386 = vmatprep.subr.bf16.mxu0 0
    %387 = vmatpush1.bf16.msra.mxu0 %v369
    %388 = vmatprep.subr.bf16.mxu0 0
    %389 = vmatpush1.bf16.msra.mxu0 %v370
    %390 = vmatprep.subr.bf16.mxu0 0
    %391 = vmatpush1.bf16.msra.mxu0 %v371
    %392 = vmatprep.subr.bf16.mxu0 0
    %393 = vmatpush1.bf16.msra.mxu0 0
    %394 = vmatprep.subr.bf16.mxu0 0
    %395 = vmatpush1.bf16.msra.mxu0 0
    %396 = vmatprep.subr.bf16.mxu0 0
    %397 = vmatpush1.bf16.msra.mxu0 0
    %398 = vmatprep.subr.bf16.mxu0 0
    %399 = vmatpush1.bf16.msra.mxu0 0
    %400 = vmatprep.subr.bf16.mxu0 0
    %401 = vmatpush1.bf16.msra.mxu0 0
    %402 = vmatprep.subr.bf16.mxu0 0
    %403 = vmatpush1.bf16.msra.mxu0 0
    %404 = vmatprep.subr.bf16.mxu0 0
    %405 = vmatpush1.bf16.msra.mxu0 0
    %406 = vmatprep.subr.bf16.mxu0 0
    %407 = vmatpush1.bf16.msra.mxu0 0
    %408 = vmatprep.subr.bf16.mxu0 0
    %409 = vmatpush1.bf16.msra.mxu0 0
    %410 = vmatprep.subr.bf16.mxu0 0
    %411 = vmatpush1.bf16.msra.mxu0 0
    %412 = vmatprep.subr.bf16.mxu0 0
    %413 = vmatpush1.bf16.msra.mxu0 0
    %414 = vmatprep.subr.bf16.mxu0 0
    %415 = vmatpush1.bf16.msra.mxu0 0
    %416 = vmatprep.mubr.bf16.mxu0 0
    %417 = vmatmul.mubr.bf16.gmra.mrb[0].mxu0 %v382
    %v418 = vpop.f32.mrb[0].mxu0
    %v419 = vadd.f32 %v380, %v418
    %v420 = vpop.f32.mrb[0].mxu0
    %v421 = vpop.f32.mrb[0].mxu0
    %v422 = vpop.f32.mrb[0].mxu0
    %423 = vdwg.mxu0
    %424 = vst [vmem:[#allocation3] sm:$0x1] %v419
    // Predicated region
    $region30: #{tpu_custom_call.1} parent=1 // pred_check
      _
    $region31: #{tpu_custom_call.1} parent=1 // pred_check_branch
      %426 = sbr.rel (0) target = $region33
    $region32: #{tpu_custom_call.1} parent=1 // pred_region
      %s428 = ssub.s32 16, 16
      %429 = vsyncadd [#allocation4], %s428
      %s431 = sshll.u32 [#allocation3], 4
      %s432 = int_to_ptr.vmem [resolvable:$true] %s431
      %434 = dma.vmem_to_hbm [thread:$0]  %s432, 16, %s7, [#allocation4]
    $region33: #{tpu_custom_call.1} parent=1 // pred_fallthru
      _
    // Predicated region
    $region34: #{tpu_custom_call.1} parent=1 // pred_check
      _
    $region35: #{tpu_custom_call.1} parent=1 // pred_check_branch
      %436 = sbr.rel (0) target = $region37
    $region36: #{tpu_custom_call.1} parent=1 // pred_region
      %437 = dma.done [#allocation4], 16
    $region37: #{tpu_custom_call.1} parent=1 // pred_fallthru
      _
    %438 = vsyncpa [#allocation4], 1

</llo_original>
